<compile_context>
chip_gen: v6e
topology: v6e:2x2x1
jax: 0.10.0
libtpu: 0.0.40
codegen_flags: <defaults>
</compile_context>

<pallas_src>
import functools
import math

import jax
import jax.numpy as jnp
from jax.experimental import pallas as pl
from jax.experimental.pallas import tpu as pltpu


_NATIVE_DTYPES = (
    jnp.dtype(jnp.float32),
    jnp.dtype(jnp.bfloat16),
    jnp.dtype(jnp.int8),
    jnp.dtype(jnp.uint8),
    jnp.dtype(jnp.int32),
    jnp.dtype(jnp.uint32),
)


def _pow(b, gamma):
    """b**gamma, repeated multiplication for small integer gamma (no exp/log on EUP)."""
    g = float(gamma)
    if g.is_integer() and 0.0 <= g <= 8.0:
        gi = int(g)
        if gi == 0:
            return jnp.ones_like(b)
        r = b
        for _ in range(gi - 1):
            r = r * b
        return r
    return jnp.power(b, g)  # non-integer gamma: exp/log fallback


def _focal_loss_math(x, t, alpha, gamma, eps):
    """Element-wise focal loss on f32 arrays; mirrors kornia's eps-clamped formula.

    Guards (clamped tanh argument, probs clipped to [0, 1], log arguments floored at
    eps) keep every log argument strictly positive for arbitrarily large |logits|
    while matching the reference to ~1e-6 even for fully saturated inputs.
    """
    xs = jnp.clip(x, -30.0, 30.0)  # sigmoid saturates in f32 long before +-30
    # sigmoid(x) = 0.5 * (tanh(x/2) + 1): a single EUP transcendental.
    probs = jnp.clip(0.5 * jnp.tanh(0.5 * xs) + 0.5, 0.0, 1.0)
    p_eps = jnp.maximum(probs, 0.0) + eps          # in [eps, 1 + eps]
    q_eps = jnp.maximum(1.0 - probs, 0.0) + eps    # in [eps, 1 + eps]
    pos = (-alpha) * _pow(q_eps, gamma) * t * jnp.log(p_eps)
    neg = (-(1.0 - alpha)) * _pow(p_eps, gamma) * (1.0 - t) * jnp.log(q_eps)
    return pos + neg


# ---------------------------------------------------------------------------
# Kernels
# ---------------------------------------------------------------------------

def _focal_none_kernel(x_ref, t_ref, o_ref, *, alpha, gamma, eps):
    x = x_ref[...].astype(jnp.float32)
    t = t_ref[...].astype(jnp.float32)
    o_ref[...] = _focal_loss_math(x, t, alpha, gamma, eps).astype(o_ref.dtype)


def _focal_sum_kernel(x_ref, t_ref, o_ref, *, alpha, gamma, eps, rows, block_rows):
    """Fused reduction: accumulate per-block partial sums into a (1, cols) output."""
    i = pl.program_id(0)

    @pl.when(i == 0)
    def _init():
        o_ref[...] = jnp.zeros_like(o_ref)

    x = x_ref[...].astype(jnp.float32)
    t = t_ref[...].astype(jnp.float32)
    loss = _focal_loss_math(x, t, alpha, gamma, eps)
    if rows % block_rows != 0:
        # Ragged last block: zero the out-of-range rows before accumulating.
        row_ids = jax.lax.broadcasted_iota(jnp.int32, loss.shape, 0) + i * block_rows
        loss = jnp.where(row_ids < rows, loss, 0.0)
    o_ref[...] += jnp.sum(loss, axis=0, keepdims=True)


# ---------------------------------------------------------------------------
# Geometry helpers
# ---------------------------------------------------------------------------

def _pick_cols(m):
    """Largest lane-dense width (multiple of 128) that divides m, or None."""
    for c in (8192, 4096, 2048, 1024, 512, 256, 128):
        if c <= m and m % c == 0:
            return c
    return None


def _sublane_align(*dtypes):
    """Sublane packing requirement of the narrowest dtype involved (8/16/32)."""
    a = 8
    for dt in dtypes:
        a = max(a, 32 // max(1, jnp.dtype(dt).itemsize))
    return a


def _pick_block_rows(rows, cols, align):
    """~2 MiB (f32-equivalent) per array per block; >=2 near-equal blocks when possible
    so v7x's two TensorCores both get work; multiples of `align` unless single-block."""
    target_elems = 512 * 1024
    cap = max(align, (target_elems // cols) // align * align)
    if rows <= cap:
        if rows < 2 * align:
            return rows                      # single block == full dim
        nblk = 2                             # split for the 2-TC 'parallel' axis
    else:
        nblk = -(-rows // cap)
    br = -(-rows // nblk)
    br = -(-br // align) * align
    return min(br, rows)


# ---------------------------------------------------------------------------
# Flat element-wise driver
# ---------------------------------------------------------------------------

def _focal_flat(logits_flat, target_flat, alpha, gamma, eps, out_dtype, reduce_to_sum):
    """Flat focal loss.  Returns the per-element loss (out_dtype) when
    reduce_to_sum=False, otherwise the f32 scalar sum over all elements."""
    m = logits_flat.shape[0]

    def jnp_loss(lf, tf):
        return _focal_loss_math(
            lf.astype(jnp.float32), tf.astype(jnp.float32), alpha, gamma, eps)

    cols = _pick_cols(m)
    if cols is not None:
        m_main, tail = m, 0
    else:
        m_main = (m // 128) * 128
        tail = m - m_main
        cols = _pick_cols(m_main) if m_main else None

    if m_main == 0:
        # Tiny input (< 128 elements): plain jnp, no kernel needed.
        loss = jnp_loss(logits_flat, target_flat)
        return jnp.sum(loss) if reduce_to_sum else loss.astype(out_dtype)

    l_main = logits_flat[:m_main] if tail else logits_flat
    t_main = target_flat[:m_main] if tail else target_flat
    rows = m_main // cols
    l2 = l_main.reshape(rows, cols)
    t2 = t_main.reshape(rows, cols)

    dtypes = [l2.dtype, t2.dtype] + ([] if reduce_to_sum else [out_dtype])
    align = _sublane_align(*dtypes)
    block_rows = _pick_block_rows(rows, cols, align)
    nblk = pl.cdiv(rows, block_rows)

    in_specs = [
        pl.BlockSpec((block_rows, cols), lambda i: (i, 0)),
        pl.BlockSpec((block_rows, cols), lambda i: (i, 0)),
    ]

    if reduce_to_sum:
        kernel = functools.partial(
            _focal_sum_kernel, alpha=float(alpha), gamma=float(gamma), eps=float(eps),
            rows=rows, block_rows=block_rows)
        partial_row = pl.pallas_call(
            kernel,
            out_shape=jax.ShapeDtypeStruct((1, cols), jnp.float32),
            grid=(nblk,),
            in_specs=in_specs,
            # Same output block every step -> VMEM-resident accumulator (P3 pattern).
            out_specs=pl.BlockSpec((1, cols), lambda i: (0, 0)),
            compiler_params=pltpu.CompilerParams(
                dimension_semantics=("arbitrary",)),
        )(l2, t2)
        total = jnp.sum(partial_row)
        if tail:
            total = total + jnp.sum(jnp_loss(logits_flat[m_main:], target_flat[m_main:]))
        return total

    kernel = functools.partial(
        _focal_none_kernel, alpha=float(alpha), gamma=float(gamma), eps=float(eps))
    loss_main = pl.pallas_call(
        kernel,
        out_shape=jax.ShapeDtypeStruct((rows, cols), out_dtype),
        grid=(nblk,),
        in_specs=in_specs,
        out_specs=pl.BlockSpec((block_rows, cols), lambda i: (i, 0)),
        compiler_params=pltpu.CompilerParams(
            dimension_semantics=("parallel",)),
    )(l2, t2)
    loss_main = loss_main.reshape(m_main)
    if tail:
        loss_tail = jnp_loss(logits_flat[m_main:], target_flat[m_main:]).astype(out_dtype)
        return jnp.concatenate([loss_main, loss_tail])
    return loss_main


# ---------------------------------------------------------------------------
# Public API (mirrors kornia / PyTorch semantics)
# ---------------------------------------------------------------------------

def _to_kernel_dtype(x):
    if x.dtype == jnp.bool_:
        return x.astype(jnp.int8)          # 1 B/elem; f32 cast happens inside the kernel
    if jnp.dtype(x.dtype) in _NATIVE_DTYPES:
        return x                            # no wrapper-side cast / extra HBM pass
    return x.astype(jnp.float32)


def binary_focal_loss_with_logits(logits, target, alpha=0.25, gamma=2.0,
                                  reduction="none", eps=1e-8):
    """JAX/Pallas port of kornia.binary_focal_loss_with_logits."""
    logits = jnp.asarray(logits)
    target = jnp.asarray(target)

    if logits.ndim < 2:
        raise ValueError(f"Invalid input shape, we expect BxCx*. Got: {logits.shape}")
    if logits.shape[0] != target.shape[0]:
        raise ValueError(
            f"Expected input batch_size ({logits.shape[0]}) to match target "
            f"batch_size ({target.shape[0]}).")
    if reduction not in ("none", "mean", "sum"):
        raise NotImplementedError(f"Invalid reduction mode: {reduction}")

    out_dtype = (logits.dtype
                 if logits.dtype in (jnp.dtype(jnp.float32), jnp.dtype(jnp.bfloat16))
                 else jnp.dtype(jnp.float32))

    logits_k = _to_kernel_dtype(logits)
    target_k = _to_kernel_dtype(target)

    # Mirrors torch: target.unsqueeze(dim=1), then broadcast against the logits.
    target_u = jnp.expand_dims(target_k, 1)
    loss_shape = jnp.broadcast_shapes(logits.shape, target_u.shape)
    if logits.shape != loss_shape:
        logits_k = jnp.broadcast_to(logits_k, loss_shape)
    if target_u.shape != loss_shape:
        # TODO(synk): for C > 1 avoid materializing this broadcast by adding a channel
        # grid axis whose target index_map ignores it (block reuse); the kornia spec's
        # C == 1 case never takes this branch.
        target_u = jnp.broadcast_to(target_u, loss_shape)

    m_total = int(math.prod(loss_shape))
    reduce_to_sum = reduction in ("mean", "sum")

    res = _focal_flat(logits_k.reshape(-1), target_u.reshape(-1),
                      alpha, gamma, eps, out_dtype, reduce_to_sum)

    if reduction == "none":
        loss = res.reshape(loss_shape)
        if loss_shape[1] == 1:
            loss = jnp.squeeze(loss, axis=1)   # matches torch .squeeze(dim=1)
        return loss
    if reduction == "mean":
        return (res / m_total).astype(out_dtype)
    return res.astype(out_dtype)               # 'sum'


class BinaryFocalLossWithLogits:
    """Module wrapper matching the PyTorch nn.Module interface (no parameters)."""

    def __init__(self, alpha: float, gamma: float = 2.0, reduction: str = "none"):
        self.alpha = alpha
        self.gamma = gamma
        self.reduction = reduction
        self.eps = 1e-8

    def __call__(self, input, target):
        return binary_focal_loss_with_logits(
            input, target, self.alpha, self.gamma, self.reduction, self.eps)

    forward = __call__


def _reference(logits, target, alpha, gamma, eps, reduction):
    """Pure-JAX mirror of the kornia/PyTorch formula (true sigmoid + jnp.power)."""
    probs = jax.nn.sigmoid(logits.astype(jnp.float32))
    t = jnp.expand_dims(target.astype(jnp.float32), 1)  # unsqueeze(dim=1)
    loss = (-alpha * jnp.power(1.0 - probs + eps, gamma) * t * jnp.log(probs + eps)
            - (1.0 - alpha) * jnp.power(probs + eps, gamma) * (1.0 - t)
            * jnp.log(1.0 - probs + eps))
    if loss.shape[1] == 1:
        loss = jnp.squeeze(loss, axis=1)
    if reduction == "mean":
        return jnp.mean(loss)
    if reduction == "sum":
        return jnp.sum(loss)
    return loss


if __name__ == "__main__":
    key = jax.random.PRNGKey(0)
    k1, k2, k3, k4, k5 = jax.random.split(key, 5)
    alpha, gamma, eps = 0.25, 2.0, 1e-8

    # --- Case 1: (N, 1, H, W) f32, 512 elems (multiple of 128), with exactly-saturating
    # logits injected to exercise the extreme-value guards inside the Pallas kernel.
    N, H, W = 2, 16, 16
    logits = jnp.clip(jax.random.normal(k1, (N, 1, H, W), jnp.float32) * 3.0, -6.0, 6.0)
    logits = logits.at[0, 0, 0, 0].set(90.0).at[0, 0, 0, 1].set(-90.0)
    logits = logits.at[1, 0, 0, 0].set(30.0).at[1, 0, 0, 1].set(-30.0)
    target = (jax.random.uniform(k2, (N, H, W)) > 0.5).astype(jnp.float32)

    crit_none = BinaryFocalLossWithLogits(alpha=alpha, gamma=gamma, reduction="none")
    out_none = jax.block_until_ready(crit_none(logits, target))
    ref_none = _reference(logits, target, alpha, gamma, eps, "none")
    assert out_none.shape == (N, H, W), out_none.shape
    assert bool(jnp.all(jnp.isfinite(out_none)))
    assert jnp.allclose(out_none, ref_none, atol=1e-3, rtol=1e-3)

    crit_mean = BinaryFocalLossWithLogits(alpha=alpha, gamma=gamma, reduction="mean")
    out_mean = jax.block_until_ready(crit_mean(logits, target))
    ref_mean = _reference(logits, target, alpha, gamma, eps, "mean")
    assert bool(jnp.isfinite(out_mean))
    assert jnp.allclose(out_mean, ref_mean, atol=1e-3, rtol=1e-3)

    # --- Case 2: kornia doctest (3 elements -> tiny plain-jnp path), mean == 4.6052.
    logits2 = jnp.array([[[[6.325]]], [[[5.26]]], [[[87.49]]]], dtype=jnp.float32)
    labels2 = jnp.array([[[1.0]], [[1.0]], [[0.0]]], dtype=jnp.float32)
    out2 = jax.block_until_ready(
        binary_focal_loss_with_logits(logits2, labels2, alpha, gamma, "mean", eps))
    ref2 = _reference(logits2, labels2, alpha, gamma, eps, "mean")
    assert bool(jnp.isfinite(out2))
    assert jnp.allclose(out2, ref2, atol=1e-4, rtol=1e-4), (out2, ref2)
    assert jnp.allclose(out2, 4.6052, atol=1e-3), out2

    # --- Case 3: integer targets passed natively (in-kernel cast), fused 'sum'.
    target_i = (jax.random.uniform(k3, (N, H, W)) > 0.5).astype(jnp.int32)
    out_sum = jax.block_until_ready(
        binary_focal_loss_with_logits(logits, target_i, alpha, gamma, "sum", eps))
    ref_sum = _reference(logits, target_i, alpha, gamma, eps, "sum")
    assert jnp.allclose(out_sum, ref_sum, atol=1e-2, rtol=1e-3)

    # --- Case 4: 260 elements (not a multiple of 128): 128-aligned prefix through the
    # kernel, <128-element tail in plain jnp (no full-tensor pad).
    logits4 = jnp.clip(jax.random.normal(k4, (2, 1, 10, 13), jnp.float32) * 3.0, -6.0, 6.0)
    target4 = (jax.random.uniform(k5, (2, 10, 13)) > 0.5).astype(jnp.float32)
    out4 = jax.block_until_ready(
        binary_focal_loss_with_logits(logits4, target4, alpha, gamma, "none", eps))
    ref4 = _reference(logits4, target4, alpha, gamma, eps, "none")
    assert out4.shape == (2, 10, 13), out4.shape
    assert jnp.allclose(out4, ref4, atol=1e-3, rtol=1e-3)

    # --- Case 5: bf16 logits passed natively; bf16 output ('none').
    logits_bf = logits.astype(jnp.bfloat16)
    out_bf = jax.block_until_ready(
        binary_focal_loss_with_logits(logits_bf, target, alpha, gamma, "none", eps))
    assert out_bf.dtype == jnp.dtype(jnp.bfloat16)
    ref_bf = _reference(logits_bf.astype(jnp.float32), target, alpha, gamma, eps, "none")
    assert jnp.allclose(out_bf.astype(jnp.float32), ref_bf, atol=5e-2, rtol=5e-2)

    print("KERNEL_OK")
</pallas_src>

<mosaic_0001>
module attributes {stable_mosaic.version = 11 : i64} {
  func.func @_focal_none_kernel(%arg0: i32, %arg1: memref<1x512xf32, #tpu.memory_space<vmem>>, %arg2: memref<1x512xf32, #tpu.memory_space<vmem>>, %arg3: memref<1x512xf32, #tpu.memory_space<vmem>>) attributes {dimension_semantics = [#tpu.dimension_semantics<parallel>], iteration_bounds = array<i64: 1>, scalar_prefetch = 0 : i64, scratch_operands = 0 : i64, tpu.core_type = #tpu.core_type<tc>, window_params = [{transform_indices = @transform_0, window_bounds = array<i64: 1, 512>}, {transform_indices = @transform_1, window_bounds = array<i64: 1, 512>}, {transform_indices = @transform_2, window_bounds = array<i64: 1, 512>}]} {
    %c0 = arith.constant 0 : index
    %c0_0 = arith.constant 0 : index
    %0 = vector.load %arg1[%c0, %c0_0] : memref<1x512xf32, #tpu.memory_space<vmem>>, vector<1x512xf32>
    %c0_1 = arith.constant 0 : index
    %c0_2 = arith.constant 0 : index
    %1 = vector.load %arg2[%c0_1, %c0_2] : memref<1x512xf32, #tpu.memory_space<vmem>>, vector<1x512xf32>
    %cst = arith.constant -3.000000e+01 : f32
    %cst_3 = arith.constant 3.000000e+01 : f32
    %2 = vector.broadcast %cst : f32 to vector<1x512xf32>
    %3 = arith.maximumf %2, %0 : vector<1x512xf32>
    %4 = vector.broadcast %cst_3 : f32 to vector<1x512xf32>
    %5 = arith.minimumf %4, %3 : vector<1x512xf32>
    %cst_4 = arith.constant 5.000000e-01 : f32
    %6 = vector.broadcast %cst_4 : f32 to vector<1x512xf32>
    %7 = arith.mulf %6, %5 : vector<1x512xf32>
    %8 = math.tanh %7 : vector<1x512xf32>
    %cst_5 = arith.constant 5.000000e-01 : f32
    %9 = vector.broadcast %cst_5 : f32 to vector<1x512xf32>
    %10 = arith.mulf %9, %8 : vector<1x512xf32>
    %cst_6 = arith.constant 5.000000e-01 : f32
    %11 = vector.broadcast %cst_6 : f32 to vector<1x512xf32>
    %12 = arith.addf %10, %11 : vector<1x512xf32>
    %cst_7 = arith.constant 0.000000e+00 : f32
    %cst_8 = arith.constant 1.000000e+00 : f32
    %13 = vector.broadcast %cst_7 : f32 to vector<1x512xf32>
    %14 = arith.maximumf %13, %12 : vector<1x512xf32>
    %15 = vector.broadcast %cst_8 : f32 to vector<1x512xf32>
    %16 = arith.minimumf %15, %14 : vector<1x512xf32>
    %cst_9 = arith.constant 0.000000e+00 : f32
    %17 = vector.broadcast %cst_9 : f32 to vector<1x512xf32>
    %18 = arith.maximumf %16, %17 : vector<1x512xf32>
    %cst_10 = arith.constant 9.99999993E-9 : f32
    %19 = vector.broadcast %cst_10 : f32 to vector<1x512xf32>
    %20 = arith.addf %18, %19 : vector<1x512xf32>
    %cst_11 = arith.constant 1.000000e+00 : f32
    %21 = vector.broadcast %cst_11 : f32 to vector<1x512xf32>
    %22 = arith.subf %21, %16 : vector<1x512xf32>
    %cst_12 = arith.constant 0.000000e+00 : f32
    %23 = vector.broadcast %cst_12 : f32 to vector<1x512xf32>
    %24 = arith.maximumf %22, %23 : vector<1x512xf32>
    %cst_13 = arith.constant 9.99999993E-9 : f32
    %25 = vector.broadcast %cst_13 : f32 to vector<1x512xf32>
    %26 = arith.addf %24, %25 : vector<1x512xf32>
    %27 = arith.mulf %26, %26 : vector<1x512xf32>
    %cst_14 = arith.constant -2.500000e-01 : f32
    %28 = vector.broadcast %cst_14 : f32 to vector<1x512xf32>
    %29 = arith.mulf %28, %27 : vector<1x512xf32>
    %30 = arith.mulf %29, %1 : vector<1x512xf32>
    %31 = math.log %20 : vector<1x512xf32>
    %32 = arith.mulf %30, %31 : vector<1x512xf32>
    %33 = arith.mulf %20, %20 : vector<1x512xf32>
    %cst_15 = arith.constant -7.500000e-01 : f32
    %34 = vector.broadcast %cst_15 : f32 to vector<1x512xf32>
    %35 = arith.mulf %34, %33 : vector<1x512xf32>
    %cst_16 = arith.constant 1.000000e+00 : f32
    %36 = vector.broadcast %cst_16 : f32 to vector<1x512xf32>
    %37 = arith.subf %36, %1 : vector<1x512xf32>
    %38 = arith.mulf %35, %37 : vector<1x512xf32>
    %39 = math.log %26 : vector<1x512xf32>
    %40 = arith.mulf %38, %39 : vector<1x512xf32>
    %41 = arith.addf %32, %40 : vector<1x512xf32>
    %c0_17 = arith.constant 0 : index
    %c0_18 = arith.constant 0 : index
    %42 = vector.load %arg3[%c0_17, %c0_18] : memref<1x512xf32, #tpu.memory_space<vmem>>, vector<1x512xf32>
    tpu.vector_store %arg3[%c0_17, %c0_18], %41 {strides = array<i32>} : memref<1x512xf32, #tpu.memory_space<vmem>>, vector<1x512xf32>,
    return
  }
  func.func @transform_0(%arg0: i32) -> (i32, i32) {
    %c0_i32 = arith.constant 0 : i32
    %c0_i32_0 = arith.constant 0 : i32
    return %arg0, %c0_i32 : i32, i32
  }
  func.func @transform_1(%arg0: i32) -> (i32, i32) {
    %c0_i32 = arith.constant 0 : i32
    %c0_i32_0 = arith.constant 0 : i32
    return %arg0, %c0_i32 : i32, i32
  }
  func.func @transform_2(%arg0: i32) -> (i32, i32) {
    %c0_i32 = arith.constant 0 : i32
    %c0_i32_0 = arith.constant 0 : i32
    return %arg0, %c0_i32 : i32, i32
  }
}

</mosaic_0001>

<llo_original>
// kernel: tpu_custom_call.1
$region0: #{tpu_custom_call.1}
  #allocation0 [shape = 'u32[]', space=smem, size = 0x4, offset = 0x4, fixed_abs, tag = 'smem constant byte address 0x4 - core index']
  #allocation1 [shape = 'u32[144,128]{1,0:T(1,128)}', space=vmem, size = 0x12000, scoped, tag = 'internal scratch']
  %s0 = inlined_call_operand.hbm [shape: f32[1,512], index: 0, kind: input, shape index: {}]
  %s1 = inlined_call_operand.hbm [shape: f32[1,512], index: 1, kind: input, shape index: {}]
  %s2 = inlined_call_operand.hbm [shape: f32[1,512], index: 2, kind: output, shape index: {}]
  %s3 = sld [smem:[#allocation0]]
  $region26: #{tpu_custom_call.1} parent=0
    _
  %s5 = ssub.s32 1, %s3
  %s6 = scalar_select 0, %s5, %s3
  $region1: #{tpu_custom_call.1} parent=0
    #allocation2 [shape = 'u8[2048]{0}', space=vmem, size = 0x800, scoped, tag = 'input window, operand 0, single buffered']
    #allocation3 [shape = 's32[1]{0}', space=sflag, size = 0x4, scoped, tag = 'scoped memory for tpu_custom_call.1']
    #allocation4 [shape = 's32[1]{0}', space=sflag, size = 0x4, scoped, tag = 'scoped memory for tpu_custom_call.1']
    #allocation5 [shape = 'u8[2048]{0}', space=vmem, size = 0x800, scoped, tag = 'input window, operand 1, single buffered']
    #allocation6 [shape = 's32[1]{0}', space=sflag, size = 0x4, scoped, tag = 'scoped memory for tpu_custom_call.1']
    #allocation7 [shape = 'u8[2048]{0}', space=vmem, size = 0x800, scoped, tag = 'output window, operand 0, single buffered']
    %7 = vsyncpa [#allocation3], 0
    %8 = vsyncpa [#allocation6], 0
    %9 = vsyncpa [#allocation4], 0
    // Predicated region
    $region2: #{tpu_custom_call.1} parent=1 // pred_check
      _
    $region3: #{tpu_custom_call.1} parent=1 // pred_check_branch
      %11 = sbr.rel (0) target = $region5
    $region4: #{tpu_custom_call.1} parent=1 // pred_region
      %s13 = ssub.s32 64, 64
      %14 = vsyncadd [#allocation3], %s13
      %s16 = sshll.u32 [#allocation2], 4
      %s17 = int_to_ptr.vmem [resolvable:$true] %s16
      %19 = dma.hbm_to_vmem [thread:$0]  %s0, 64, %s17, [#allocation3]
    $region5: #{tpu_custom_call.1} parent=1 // pred_fallthru
      _
    // Predicated region
    $region6: #{tpu_custom_call.1} parent=1 // pred_check
      _
    $region7: #{tpu_custom_call.1} parent=1 // pred_check_branch
      %21 = sbr.rel (0) target = $region9
    $region8: #{tpu_custom_call.1} parent=1 // pred_region
      %s23 = ssub.s32 64, 64
      %24 = vsyncadd [#allocation6], %s23
      %s26 = sshll.u32 [#allocation5], 4
      %s27 = int_to_ptr.vmem [resolvable:$true] %s26
      %29 = dma.hbm_to_vmem [thread:$0]  %s1, 64, %s27, [#allocation6]
    $region9: #{tpu_custom_call.1} parent=1 // pred_fallthru
      _
    // Predicated region
    $region10: #{tpu_custom_call.1} parent=1 // pred_check
      _
    $region11: #{tpu_custom_call.1} parent=1 // pred_check_branch
      %31 = sbr.rel (0) target = $region13
    $region12: #{tpu_custom_call.1} parent=1 // pred_region
      %32 = dma.done [#allocation3], 64
    $region13: #{tpu_custom_call.1} parent=1 // pred_fallthru
      _
    // Predicated region
    $region14: #{tpu_custom_call.1} parent=1 // pred_check
      _
    $region15: #{tpu_custom_call.1} parent=1 // pred_check_branch
      %34 = sbr.rel (0) target = $region17
    $region16: #{tpu_custom_call.1} parent=1 // pred_region
      %35 = dma.done [#allocation6], 64
    $region17: #{tpu_custom_call.1} parent=1 // pred_fallthru
      _
    %v36 = vld [vmem:[#allocation2] sm:$0xf]
    %v37 = vld [vmem:[#allocation5] sm:$0xf]
    %v38 = vmax.f32 %v36, -30.0
    %v39 = vmin.f32 %v38, 30.0
    %v40 = vmul.f32 %v39, 0.5
    %v41 = vtanh.pop %v40
    %v42 = vmul.f32 %v41, 0.5
    %v43 = vadd.f32 %v42, 0.5
    %v44 = vmax.f32 %v43, 0.0
    %v45 = vmin.f32 %v44, 1.0
    %v46 = vmax.f32 %v45, 0.0
    %v47 = vadd.f32 %v46, 1e-08
    %v48 = vsub.f32 1.0, %v45
    %v49 = vmax.f32 %v48, 0.0
    %v50 = vadd.f32 %v49, 1e-08
    %v51 = vmul.f32 %v50, %v50
    %v52 = vmul.f32 %v51, -0.25
    %v53 = vmul.f32 %v52, %v37
    %v54 = vlog2.pop %v47
    %v55 = vmul.f32 %v54, 0.6931472
    %v56 = vmul.f32 %v53, %v55
    %v57 = vmul.f32 %v47, %v47
    %v58 = vmul.f32 %v57, -0.75
    %v59 = vsub.f32 1.0, %v37
    %v60 = vmul.f32 %v58, %v59
    %v61 = vlog2.pop %v50
    %v62 = vmul.f32 %v61, 0.6931472
    %v63 = vmul.f32 %v60, %v62
    %v64 = vadd.f32 %v56, %v63
    %v65 = vlaneseq
    %vm66 = vcmp.ge.s32.totalorder %v65, 0
    %vm67 = vcmp.lt.s32.totalorder %v65, 512
    %vm68 = vmand %vm66, %vm67
    %69 = vst.msk [vmem:[#allocation7] sm:$0xf] %vm68, %v64
    // Predicated region
    $region18: #{tpu_custom_call.1} parent=1 // pred_check
      _
    $region19: #{tpu_custom_call.1} parent=1 // pred_check_branch
      %71 = sbr.rel (0) target = $region21
    $region20: #{tpu_custom_call.1} parent=1 // pred_region
      %s73 = ssub.s32 64, 64
      %74 = vsyncadd [#allocation4], %s73
      %s76 = sshll.u32 [#allocation7], 4
      %s77 = int_to_ptr.vmem [resolvable:$true] %s76
      %79 = dma.vmem_to_hbm [thread:$0]  %s77, 64, %s2, [#allocation4]
    $region21: #{tpu_custom_call.1} parent=1 // pred_fallthru
      _
    // Predicated region
    $region22: #{tpu_custom_call.1} parent=1 // pred_check
      _
    $region23: #{tpu_custom_call.1} parent=1 // pred_check_branch
      %81 = sbr.rel (0) target = $region25
    $region24: #{tpu_custom_call.1} parent=1 // pred_region
      %82 = dma.done [#allocation4], 64
    $region25: #{tpu_custom_call.1} parent=1 // pred_fallthru
      _
    %83 = vsyncpa [#allocation3], 1
    %84 = vsyncpa [#allocation6], 1
    %85 = vsyncpa [#allocation4], 1

</llo_original>
